<compile_context>
chip_gen: v7x
topology: tpu7x:2x2x1
jax: 0.10.0
libtpu: 0.0.40
codegen_flags: <defaults>
</compile_context>

<pallas_src>
import jax
import jax.numpy as jnp
from jax.experimental import pallas as pl
from jax.experimental.pallas import tpu as pltpu


def _inv_norm_kernel(x_ref, std_ref, mean_ref, o_ref):
    # Kernel view: x_ref/o_ref are (C, tile); std_ref/mean_ref are (C, 1) f32
    # and broadcast over the lane axis.  y = x * std + mean, computed in f32.
    x = x_ref[...].astype(jnp.float32)
    y = x * std_ref[...] + mean_ref[...]
    o_ref[...] = y.astype(o_ref.dtype)


def _round_up(n, m):
    return ((n + m - 1) // m) * m


def _pick_tile(hw, c, itemsize):
    """Spatial (lane) tile size.

    - multiple of 128 lanes (unmasked vst), unless the whole spatial extent is
      smaller than 128 (then a full-extent block is used).
    - ~1 MiB per x block after sublane padding (C -> multiple of 8), so the
      double-buffered in+out pipeline fits every chip's default scoped VMEM.
    - at most half the spatial extent, so large images get >= 2 grid steps
      and both v7x TensorCores stream data.
    """
    if hw < 128:
        return hw  # full-extent block is exempt from the 128-lane rule
    c_pad = max(8, _round_up(c, 8))
    vmem_cap_lanes = max(128, ((1 << 20) // (c_pad * itemsize)) // 128 * 128)
    half = _round_up(pl.cdiv(hw, 2), 128)
    return min(vmem_cap_lanes, max(128, half))


@jax.jit
def inverse_normalization_forward(x, mean, std):
    """x: [N, C, H, W] -> (x[0] * std + mean)[None] with shape [1, C, H, W]."""
    n, c, h, w = x.shape
    hw = h * w
    itemsize = jnp.dtype(x.dtype).itemsize
    tile = _pick_tile(hw, c, itemsize)
    grid = (pl.cdiv(hw, tile),)

    # Free reshapes of contiguous data (no copies).
    x_flat = x.reshape(n, c, hw)
    std_c = std.reshape(c, 1).astype(jnp.float32)
    mean_c = mean.reshape(c, 1).astype(jnp.float32)

    cost = pl.CostEstimate(
        flops=2 * c * hw,
        transcendentals=0,
        bytes_accessed=itemsize * 2 * c * hw + 4 * 2 * c,
    )

    out = pl.pallas_call(
        _inv_norm_kernel,
        out_shape=jax.ShapeDtypeStruct((c, hw), x.dtype),
        grid=grid,
        in_specs=[
            # x: batch dim squeezed (select batch 0 in the index_map),
            # spatial axis pipelined in `tile`-lane blocks.
            pl.BlockSpec((None, c, tile), lambda i: (0, 0, i)),
            pl.BlockSpec((c, 1), lambda i: (0, 0)),   # std,  VMEM-resident f32
            pl.BlockSpec((c, 1), lambda i: (0, 0)),   # mean, VMEM-resident f32
        ],
        out_specs=pl.BlockSpec((c, tile), lambda i: (0, i)),
        compiler_params=pltpu.CompilerParams(
            dimension_semantics=("parallel",)),
        cost_estimate=cost,
    )(x_flat, std_c, mean_c)

    # Free reshape back to image layout; re-add the batch=1 axis.
    return out.reshape(1, c, h, w)


def inverse_normalization_reference(x, mean, std):
    """Pure-JAX reference: y = x[0] * std + mean, unsqueezed to batch 1."""
    return (x[0] * std[:, None, None] + mean[:, None, None])[None]


if __name__ == "__main__":
    key = jax.random.PRNGKey(0)

    batch, c, h, w = 2, 3, 16, 16
    x = jax.random.normal(key, (batch, c, h, w), jnp.float32)
    mean = jnp.array([0.5, 0.5, 0.5], jnp.float32)   # module defaults
    std = jnp.array([2.0, 2.0, 2.0], jnp.float32)

    out = inverse_normalization_forward(x, mean, std)
    out = jax.block_until_ready(out)

    ref = inverse_normalization_reference(x, mean, std)
    assert out.shape == (1, c, h, w)
    assert jnp.allclose(out, ref, atol=1e-6, rtol=1e-6)

    print("KERNEL_OK")
</pallas_src>

<mosaic_0001>
module attributes {stable_mosaic.version = 11 : i64} {
  func.func @_inv_norm_kernel(%arg0: i32, %arg1: memref<1x3x128xf32, #tpu.memory_space<vmem>>, %arg2: memref<3x1xf32, #tpu.memory_space<vmem>>, %arg3: memref<3x1xf32, #tpu.memory_space<vmem>>, %arg4: memref<3x128xf32, #tpu.memory_space<vmem>>) attributes {dimension_semantics = [#tpu.dimension_semantics<parallel>], iteration_bounds = array<i64: 2>, scalar_prefetch = 0 : i64, scratch_operands = 0 : i64, tpu.core_type = #tpu.core_type<tc>, window_params = [{transform_indices = @transform_0, window_bounds = array<i64: 1, 3, 128>}, {pipeline_mode = #tpu.pipeline_mode<synchronous>, transform_indices = @transform_1, window_bounds = array<i64: 3, 1>}, {pipeline_mode = #tpu.pipeline_mode<synchronous>, transform_indices = @transform_2, window_bounds = array<i64: 3, 1>}, {transform_indices = @transform_3, window_bounds = array<i64: 3, 128>}]} {
    %c0 = arith.constant 0 : index
    %c0_0 = arith.constant 0 : index
    %c0_1 = arith.constant 0 : index
    %0 = vector.load %arg1[%c0, %c0_0, %c0_1] : memref<1x3x128xf32, #tpu.memory_space<vmem>>, vector<1x3x128xf32>
    %1 = vector.shape_cast %0 : vector<1x3x128xf32> to vector<3x128xf32>
    %c0_2 = arith.constant 0 : index
    %c0_3 = arith.constant 0 : index
    %2 = vector.load %arg2[%c0_2, %c0_3] : memref<3x1xf32, #tpu.memory_space<vmem>>, vector<3x1xf32>
    %3 = vector.broadcast %2 : vector<3x1xf32> to vector<3x128xf32>
    %4 = arith.mulf %1, %3 : vector<3x128xf32>
    %c0_4 = arith.constant 0 : index
    %c0_5 = arith.constant 0 : index
    %5 = vector.load %arg3[%c0_4, %c0_5] : memref<3x1xf32, #tpu.memory_space<vmem>>, vector<3x1xf32>
    %6 = vector.broadcast %5 : vector<3x1xf32> to vector<3x128xf32>
    %7 = arith.addf %4, %6 : vector<3x128xf32>
    %c0_6 = arith.constant 0 : index
    %c0_7 = arith.constant 0 : index
    %8 = vector.load %arg4[%c0_6, %c0_7] : memref<3x128xf32, #tpu.memory_space<vmem>>, vector<3x128xf32>
    tpu.vector_store %arg4[%c0_6, %c0_7], %7 {strides = array<i32>} : memref<3x128xf32, #tpu.memory_space<vmem>>, vector<3x128xf32>,
    return
  }
  func.func @transform_0(%arg0: i32) -> (i32, i32, i32) {
    %c0_i32 = arith.constant 0 : i32
    %c0_i32_0 = arith.constant 0 : i32
    %c0_i32_1 = arith.constant 0 : i32
    return %c0_i32, %c0_i32_0, %arg0 : i32, i32, i32
  }
  func.func @transform_1(%arg0: i32) -> (i32, i32) {
    %c0_i32 = arith.constant 0 : i32
    %c0_i32_0 = arith.constant 0 : i32
    %c0_i32_1 = arith.constant 0 : i32
    return %c0_i32, %c0_i32_0 : i32, i32
  }
  func.func @transform_2(%arg0: i32) -> (i32, i32) {
    %c0_i32 = arith.constant 0 : i32
    %c0_i32_0 = arith.constant 0 : i32
    %c0_i32_1 = arith.constant 0 : i32
    return %c0_i32, %c0_i32_0 : i32, i32
  }
  func.func @transform_3(%arg0: i32) -> (i32, i32) {
    %c0_i32 = arith.constant 0 : i32
    %c0_i32_0 = arith.constant 0 : i32
    return %c0_i32, %arg0 : i32, i32
  }
}

</mosaic_0001>

<llo_original>
// kernel: inverse_normalization_forward.1
$region0: #{inverse_normalization_forward.1}
  #allocation0 [shape = 'u32[]', space=smem, size = 0x4, offset = 0x4, fixed_abs, tag = 'smem constant byte address 0x4 - core index']
  #allocation1 [shape = 'u32[144,128]{1,0:T(1,128)}', space=vmem, size = 0x12000, scoped, tag = 'internal scratch']
  %s0 = inlined_call_operand.vmem [shape: f32[2,3,256], index: 0, kind: input, shape index: {}]
  %s1 = inlined_call_operand.vmem [shape: f32[3,1], index: 1, kind: input, shape index: {}]
  %s2 = inlined_call_operand.vmem [shape: f32[3,1], index: 2, kind: input, shape index: {}]
  %s3 = inlined_call_operand.vmem [shape: f32[3,256], index: 3, kind: output, shape index: {}]
  %s4 = sld [smem:[#allocation0]]
  $region45: #{inverse_normalization_forward.1} parent=0
    _
  %s6 = ssub.s32 1, %s4
  %s7 = scalar_select 0, %s6, %s4
  loop: start=0, step=1, limit=4
  $region2: #{inverse_normalization_forward.1} parent=0 // loop_pre_header
    _
  $region3: #{inverse_normalization_forward.1} parent=0 // loop_header
    %s9 = sphi 0, %s13
    %p10 = scmp.ge.s32.totalorder %s9, 4
    %s19 = sphi 0, %s21
    %s22 = sphi 0, %s19
    %s23 = sphi 0, %s22
    %s39 = sphi 0, %s23
    %s43 = sphi 0, %s43
    %s45 = sphi 0, %s43
    %s46 = sphi 0, %s45
    %s60 = sphi 0, %s46
    %s64 = sphi 0, %s64
    %s66 = sphi 0, %s64
    %s67 = sphi 0, %s66
    %s81 = sphi 0, %s67
    %s87 = sphi 0, %s89
    %s90 = sphi 0, %s87
    %s91 = sphi 0, %s90
    %s107 = sphi 0, %s91
  $region4: #{inverse_normalization_forward.1} parent=0 // loop_header_branch
    %12 = sbr.rel (%p10) target = $region8
  $region5: #{inverse_normalization_forward.1} parent=0 // loop_body
    %s14 = ssub.s32 %s9, 1
    %s15 = ssub.s32 %s9, 2
    %s16 = sadd.s32 %s9, 1
    %s17 = ssub.s32 %s9, %s16
    %p18 = scmp.eq.s32.totalorder %s17, 0
    %s20 = sadd.s32 %s19, 1
    %s21 = scalar_select %p18, %s19, %s20
    %p24 = pneg %p18
    %p25 = scmp.eq.s32.totalorder %s9, 1
    %p26 = por %p24, %p25
    %p27 = scmp.ne.s32.totalorder %s19, %s22
    %p28 = scmp.eq.s32.totalorder %s9, 0
    %p29 = por %p27, %p28
    %p30 = scmp.ne.s32.totalorder %s19, %s22
    %p31 = scmp.eq.s32.totalorder %s14, 1
    %p32 = por %p30, %p31
    %p33 = scmp.ne.s32.totalorder %s22, %s23
    %p34 = scmp.eq.s32.totalorder %s14, 0
    %p35 = por %p33, %p34
    %p36 = scmp.ne.s32.totalorder %s22, %s23
    %p37 = scmp.eq.s32.totalorder %s15, 1
    %p38 = por %p36, %p37
    %p40 = scmp.ne.s32.totalorder %s23, %s39
    %p41 = scmp.eq.s32.totalorder %s15, 0
    %p42 = por %p40, %p41
    %s44 = sadd.s32 %s43, 1
    %p47 = scmp.eq.s32.totalorder %s9, 1
    %p48 = scmp.ne.s32.totalorder %s43, %s45
    %p49 = scmp.eq.s32.totalorder %s9, 0
    %p50 = por %p48, %p49
    %p51 = scmp.ne.s32.totalorder %s43, %s45
    %p52 = scmp.eq.s32.totalorder %s14, 1
    %p53 = por %p51, %p52
    %p54 = scmp.ne.s32.totalorder %s45, %s46
    %p55 = scmp.eq.s32.totalorder %s14, 0
    %p56 = por %p54, %p55
    %p57 = scmp.ne.s32.totalorder %s45, %s46
    %p58 = scmp.eq.s32.totalorder %s15, 1
    %p59 = por %p57, %p58
    %p61 = scmp.ne.s32.totalorder %s46, %s60
    %p62 = scmp.eq.s32.totalorder %s15, 0
    %p63 = por %p61, %p62
    %s65 = sadd.s32 %s64, 1
    %p68 = scmp.eq.s32.totalorder %s9, 1
    %p69 = scmp.ne.s32.totalorder %s64, %s66
    %p70 = scmp.eq.s32.totalorder %s9, 0
    %p71 = por %p69, %p70
    %p72 = scmp.ne.s32.totalorder %s64, %s66
    %p73 = scmp.eq.s32.totalorder %s14, 1
    %p74 = por %p72, %p73
    %p75 = scmp.ne.s32.totalorder %s66, %s67
    %p76 = scmp.eq.s32.totalorder %s14, 0
    %p77 = por %p75, %p76
    %p78 = scmp.ne.s32.totalorder %s66, %s67
    %p79 = scmp.eq.s32.totalorder %s15, 1
    %p80 = por %p78, %p79
    %p82 = scmp.ne.s32.totalorder %s67, %s81
    %p83 = scmp.eq.s32.totalorder %s15, 0
    %p84 = por %p82, %p83
    %s85 = ssub.s32 %s9, %s16
    %p86 = scmp.eq.s32.totalorder %s85, 0
    %s88 = sadd.s32 %s87, 1
    %s89 = scalar_select %p86, %s87, %s88
    %p92 = pneg %p86
    %p93 = scmp.eq.s32.totalorder %s9, 1
    %p94 = por %p92, %p93
    %p95 = scmp.ne.s32.totalorder %s87, %s90
    %p96 = scmp.eq.s32.totalorder %s9, 0
    %p97 = por %p95, %p96
    %p98 = scmp.ne.s32.totalorder %s87, %s90
    %p99 = scmp.eq.s32.totalorder %s14, 1
    %p100 = por %p98, %p99
    %p101 = scmp.ne.s32.totalorder %s90, %s91
    %p102 = scmp.eq.s32.totalorder %s14, 0
    %p103 = por %p101, %p102
    %p104 = scmp.ne.s32.totalorder %s90, %s91
    %p105 = scmp.eq.s32.totalorder %s15, 1
    %p106 = por %p104, %p105
    %p108 = scmp.ne.s32.totalorder %s91, %s107
    %p109 = scmp.eq.s32.totalorder %s15, 0
    %p110 = por %p108, %p109
    %p111 = scmp.le.s32.totalorder 1, %s9
    %p112 = scmp.lt.s32.totalorder %s9, 3
    %p113 = pnand %p111, %p112
    %p114 = pneg %p113
    // Predicated region
    $region9: #{inverse_normalization_forward.1} parent=5 // pred_check
      _
    $region10: #{inverse_normalization_forward.1} parent=5 // pred_check_branch
      %116 = sbr.rel (%p113) target = $region12
    $region11: #{inverse_normalization_forward.1} parent=5 // pred_region
      %s117 = ssub.s32 %s9, 1
      // Predicated region
      $region13: #{inverse_normalization_forward.1} parent=11 // pred_check
        %p118 = pneg %p56
      $region14: #{inverse_normalization_forward.1} parent=11 // pred_check_branch
        %120 = sbr.rel (%p118) target = $region16
      $region15: #{inverse_normalization_forward.1} parent=11 // pred_region
        _
      $region16: #{inverse_normalization_forward.1} parent=11 // pred_fallthru
        _
      // Predicated region
      $region17: #{inverse_normalization_forward.1} parent=11 // pred_check
        %p121 = pneg %p77
      $region18: #{inverse_normalization_forward.1} parent=11 // pred_check_branch
        %123 = sbr.rel (%p121) target = $region20
      $region19: #{inverse_normalization_forward.1} parent=11 // pred_region
        _
      $region20: #{inverse_normalization_forward.1} parent=11 // pred_fallthru
        _
    $region12: #{inverse_normalization_forward.1} parent=5 // pred_fallthru
      _
    %p124 = scmp.lt.s32.totalorder %s9, 2
    // Predicated region
    $region21: #{inverse_normalization_forward.1} parent=5 // pred_check
      %p125 = pneg %p124
    $region22: #{inverse_normalization_forward.1} parent=5 // pred_check_branch
      %127 = sbr.rel (%p125) target = $region24
    $region23: #{inverse_normalization_forward.1} parent=5 // pred_region
      // Predicated region
      $region25: #{inverse_normalization_forward.1} parent=23 // pred_check
        %p128 = pneg %p29
      $region26: #{inverse_normalization_forward.1} parent=23 // pred_check_branch
        %130 = sbr.rel (%p128) target = $region28
      $region27: #{inverse_normalization_forward.1} parent=23 // pred_region
        %p131 = scmp.lt.s32.totalorder %s9, 1
        %s132 = scalar_select %p131, %s9, 1
        %s133 = smul.addr %s132, 4
        %s134 = scalar_lea.vmem %s0, %s133
      $region28: #{inverse_normalization_forward.1} parent=23 // pred_fallthru
        _
    $region24: #{inverse_normalization_forward.1} parent=5 // pred_fallthru
      _
    %p135 = scmp.le.s32.totalorder 1, %s9
    %p136 = scmp.lt.s32.totalorder %s9, 3
    %p137 = pnand %p135, %p136
    %p138 = pneg %p137
    // Predicated region
    $region29: #{inverse_normalization_forward.1} parent=5 // pred_check
      _
    $region30: #{inverse_normalization_forward.1} parent=5 // pred_check_branch
      %140 = sbr.rel (%p137) target = $region32
    $region31: #{inverse_normalization_forward.1} parent=5 // pred_region
      %s141 = ssub.s32 %s9, 1
      %p142 = scmp.lt.s32.totalorder %s14, 1
      %s143 = scalar_select %p142, %s14, 1
      %s144 = smul.addr %s143, 4
      %s145 = scalar_lea.vmem %s0, %s144
      %p146 = pneg %p35
      %p147 = pneg %p32
      %p148 = pneg %p56
      %p149 = pneg %p53
      %p150 = pneg %p77
      %p151 = pneg %p74
      %p152 = pneg %p103
      %p153 = pneg %p100
      %p154 = scmp.lt.s32.totalorder %s14, 1
      %s155 = scalar_select %p154, %s14, 1
      %s156 = smul.addr %s155, 4
      %s157 = scalar_lea.vmem %s3, %s156
      %p158 = scmp.lt.s32.totalorder %s14, 1
      %s159 = scalar_select %p158, %s14, 1
      %s160 = smul.addr %s159, 4
      %s161 = scalar_lea.vmem %s0, %s160
      %p162 = scmp.lt.s32.totalorder %s14, 1
      %s163 = scalar_select %p162, %s14, 1
      %s164 = smul.addr %s163, 4
      %s165 = scalar_lea.vmem %s3, %s164
      %v166 = vld [vmem:[%s161] sm:$0x7]
      %v167 = vld [vmem:[%s1] sm:$0x7]
      %169 = vset.pattern.permute.xlu0 0
      %170 = vperm.xlu0 %169, %v167
      %v171 = vpop.permute.xlu0 %170
      %v173 = vmul.f32 %v166, %v171
      %v174 = vld [vmem:[%s2] sm:$0x7]
      %176 = vset.pattern.permute.xlu0 0
      %177 = vperm.xlu0 %176, %v174
      %v178 = vpop.permute.xlu0 %177
      %v180 = vadd.f32 %v173, %v178
      %181 = vst [vmem:[%s165] sm:$0x7] %v180
      %p182 = scmp.lt.s32.totalorder %s14, 1
      %s183 = scalar_select %p182, %s14, 1
      %s184 = smul.addr %s183, 4
      %s185 = scalar_lea.vmem %s3, %s184
      // Predicated region
      $region33: #{inverse_normalization_forward.1} parent=31 // pred_check
        %p186 = pneg %p100
      $region34: #{inverse_normalization_forward.1} parent=31 // pred_check_branch
        %188 = sbr.rel (%p186) target = $region36
      $region35: #{inverse_normalization_forward.1} parent=31 // pred_region
        _
      $region36: #{inverse_normalization_forward.1} parent=31 // pred_fallthru
        _
    $region32: #{inverse_normalization_forward.1} parent=5 // pred_fallthru
      _
    %p189 = scmp.le.s32.totalorder 2, %s9
    // Predicated region
    $region37: #{inverse_normalization_forward.1} parent=5 // pred_check
      %p190 = pneg %p189
    $region38: #{inverse_normalization_forward.1} parent=5 // pred_check_branch
      %192 = sbr.rel (%p190) target = $region40
    $region39: #{inverse_normalization_forward.1} parent=5 // pred_region
      %s193 = ssub.s32 %s9, 2
      // Predicated region
      $region41: #{inverse_normalization_forward.1} parent=39 // pred_check
        %p194 = pneg %p106
      $region42: #{inverse_normalization_forward.1} parent=39 // pred_check_branch
        %196 = sbr.rel (%p194) target = $region44
      $region43: #{inverse_normalization_forward.1} parent=39 // pred_region
        %p197 = scmp.lt.s32.totalorder %s15, 1
        %s198 = scalar_select %p197, %s15, 1
        %s199 = smul.addr %s198, 4
        %s200 = scalar_lea.vmem %s3, %s199
      $region44: #{inverse_normalization_forward.1} parent=39 // pred_fallthru
        _
    $region40: #{inverse_normalization_forward.1} parent=5 // pred_fallthru
      _
  $region6: #{inverse_normalization_forward.1} parent=0 // loop_footer
    %s13 = sadd.s32 1, %s9
  $region7: #{inverse_normalization_forward.1} parent=0 // loop_footer_branch
    %8 = sbr.rel target = $region3
  $region8: #{inverse_normalization_forward.1} parent=0 // loop_exit
    _

</llo_original>
